<compile_context>
chip_gen: v7x
topology: tpu7x:2x2x1
jax: 0.10.0
libtpu: 0.0.40
codegen_flags: <defaults>
</compile_context>

<pallas_src>
import jax
import jax.numpy as jnp
from jax import lax
from jax.experimental import pallas as pl
from jax.experimental.pallas import tpu as pltpu


def _depthnet4_kernel(x_ref, w1_ref, b1_ref, w2_ref, b2_ref, w3_ref, b3_ref,
                      o_ref):
    # x_ref : (TMp, 128)  packed batch tile: packed row r holds batch rows
    #                     4r..4r+3, sample g in lanes [32g, 32g+32)
    # w1_ref: (128, 64)   blockdiag(W1.T x 4)
    # b1_ref: (1, 64)     tile(b1, 4)
    # w2_ref: (64, 64)    blockdiag(W2.T x 4)
    # b2_ref: (1, 64)     tile(b2, 4)
    # w3_ref: (4, 64)     row g holds W3 in lanes [16g, 16g+16)
    # b3_ref: (1, 1)
    # o_ref : (4, TMp)    o[g, r] = y[4r + g]   (lane-dense output block)
    x = x_ref[...]                                                 # (TMp, 128)

    # Layer 1+2 in canonical MXU orientation (streamed tile = moving LHS with
    # contraction on lanes; packed weights = small stationary RHS): no relayout
    # of the large operand.  Block-diagonal zeros contribute exact zeros.
    h1 = jnp.dot(x, w1_ref[...], preferred_element_type=jnp.float32)
    h1 = jnp.maximum(h1 + b1_ref[...], 0.0)                        # (TMp, 64)

    h2 = jnp.dot(h1, w2_ref[...], preferred_element_type=jnp.float32)
    h2 = jnp.maximum(h2 + b2_ref[...], 0.0)                        # (TMp, 64)

    # Final 16 -> 1 per packed group, emitted directly in (4, TMp) orientation
    # (contract the feature/lane dims of both operands) so the result is
    # lane-dense along the batch tile: unmasked stores + dense writeback DMA.
    y = lax.dot_general(w3_ref[...], h2, (((1,), (1,)), ((), ())),
                        preferred_element_type=jnp.float32)
    y = y + b3_ref[...]                                            # (4, TMp)
    o_ref[...] = y.astype(o_ref.dtype)


def depthnet4_forward(x, params, *, tile_m=32768, min_tile_m=1024):
    """x: (N, nF, H, W) float32 with nF*H*W == input_dim (must divide 128).

    Returns (N, 1) float32, matching the PyTorch depthnet4 forward.
    """
    w1, b1, w2, b2, w3, b3 = params                # PyTorch (out, in) layouts
    N = x.shape[0]
    x_flat = x.reshape(N, -1)                      # matches torch .view(N, -1)
    D = x_flat.shape[1]
    F = w1.shape[0]
    assert D == w1.shape[1], "nF*H*W must equal input_dim"
    assert 128 % D == 0, "packed-lane path requires input_dim to divide 128"
    pack = 128 // D                                # batch rows per 128-lane row
    pkF = pack * F

    # Tile choice: large by default (amortizes ~0.35 us/step overhead), shrunk
    # for small N so the grid has >= 4 steps (v7x dual-TC balance) and padding
    # waste stays bounded.  tm % (pack*128) == 0 keeps the packed tile's
    # sublane count a multiple of 8 and the output block lane-dense.
    tm = max(int(tile_m), int(min_tile_m))
    assert tm % (pack * 128) == 0 and min_tile_m % (pack * 128) == 0
    while tm > min_tile_m and pl.cdiv(N, tm) < 4:
        tm //= 2
    num_tiles = pl.cdiv(N, tm)
    n_pad = num_tiles * tm
    if n_pad != N:                                 # pad batch to a tile multiple
        x_flat = jnp.pad(x_flat, ((0, n_pad - N), (0, 0)))

    # Free view: `pack` consecutive rows -> one dense 128-lane row.
    xp = x_flat.reshape(n_pad // pack, pack * D)
    tmp = tm // pack                               # packed rows per grid step

    # Packed block-diagonal weights (built once per call; tiny).
    eye = jnp.eye(pack, dtype=w1.dtype)
    w1p = jnp.kron(eye, w1.T)                      # (pack*D, pack*F) = (128, 64)
    w2p = jnp.kron(eye, w2.T)                      # (64, 64)
    w3t = jnp.kron(eye, w3)                        # (pack, pack*F)   = (4, 64)
    b1p = jnp.tile(b1, pack).reshape(1, pkF)
    b2p = jnp.tile(b2, pack).reshape(1, pkF)
    b3p = b3.reshape(1, 1)

    # Advisory cost hint (padded rows, real streamed bytes) for XLA's scheduler.
    flops = 2 * n_pad * (D * F + F * F + F)
    bytes_accessed = 4 * (n_pad * D + n_pad
                          + w1p.size + w2p.size + w3t.size + 2 * pkF + 1)

    out = pl.pallas_call(
        _depthnet4_kernel,
        out_shape=jax.ShapeDtypeStruct((pack, n_pad // pack), jnp.float32),
        grid_spec=pltpu.PrefetchScalarGridSpec(
            num_scalar_prefetch=0,
            grid=(num_tiles,),
            in_specs=[
                pl.BlockSpec((tmp, pack * D), lambda i: (i, 0)),   # x: streamed
                pl.BlockSpec((pack * D, pkF), lambda i: (0, 0)),   # resident
                pl.BlockSpec((1, pkF), lambda i: (0, 0)),
                pl.BlockSpec((pkF, pkF), lambda i: (0, 0)),
                pl.BlockSpec((1, pkF), lambda i: (0, 0)),
                pl.BlockSpec((pack, pkF), lambda i: (0, 0)),
                pl.BlockSpec((1, 1), lambda i: (0, 0)),
            ],
            out_specs=pl.BlockSpec((pack, tmp), lambda i: (0, i)),
        ),
        compiler_params=pltpu.CompilerParams(
            # "parallel" shards the batch grid across TensorCores on multi-TC
            # parts; no effect (and harmless) on single-TC v5e/v6e.
            dimension_semantics=("parallel",),
            # ~20 MiB actually used at tmp=8192; raising the scoped limit is
            # mainly for v5e's 16 MiB default.  Stays well under v7x's 64 MiB.
            vmem_limit_bytes=48 * 1024 * 1024,
        ),
        cost_estimate=pl.CostEstimate(flops=flops, transcendentals=0,
                                      bytes_accessed=bytes_accessed),
    )(xp, w1p, b1p, w2p, b2p, w3t, b3p)

    # out[g, q] = y[pack*q + g]; tiny wrapper transpose restores batch order.
    return out.T.reshape(n_pad, 1)[:N]


def init_params(key, input_dim=32, num_features=16):
    """Deterministic synthetic parameters in PyTorch Linear (out, in) layout."""
    ks = jax.random.split(key, 6)
    s1 = 1.0 / jnp.sqrt(input_dim)
    s2 = 1.0 / jnp.sqrt(num_features)
    w1 = jax.random.uniform(ks[0], (num_features, input_dim), jnp.float32, -s1, s1)
    b1 = jax.random.uniform(ks[1], (num_features,), jnp.float32, -s1, s1)
    w2 = jax.random.uniform(ks[2], (num_features, num_features), jnp.float32, -s2, s2)
    b2 = jax.random.uniform(ks[3], (num_features,), jnp.float32, -s2, s2)
    w3 = jax.random.uniform(ks[4], (1, num_features), jnp.float32, -s2, s2)
    b3 = jax.random.uniform(ks[5], (1,), jnp.float32, -s2, s2)
    return (w1, b1, w2, b2, w3, b3)


def _reference_forward(x, params):
    """Pure-JAX reference of the PyTorch forward for correctness checking."""
    w1, b1, w2, b2, w3, b3 = params
    N = x.shape[0]
    h = x.reshape(N, -1)
    h = jnp.maximum(h @ w1.T + b1, 0.0)
    h = jnp.maximum(h @ w2.T + b2, 0.0)
    return h @ w3.T + b3


if __name__ == "__main__":
    key = jax.random.PRNGKey(0)
    k_x, k_p, k_x2 = jax.random.split(key, 3)

    # (N, nF, H, W) with nF*H*W == input_dim == 32
    N, nF, H, W = 4, 2, 4, 4
    x = jax.random.normal(k_x, (N, nF, H, W), dtype=jnp.float32)
    params = init_params(k_p, input_dim=nF * H * W, num_features=16)

    out = jax.block_until_ready(depthnet4_forward(x, params))
    ref = _reference_forward(x, params)
    assert out.shape == (N, 1)
    assert jnp.allclose(out, ref, atol=1e-4, rtol=1e-5)

    # Multi-tile + batch-remainder path (still small/fast).
    N2 = 1037
    x2 = jax.random.normal(k_x2, (N2, nF, H, W), dtype=jnp.float32)
    out2 = jax.block_until_ready(depthnet4_forward(x2, params))
    ref2 = _reference_forward(x2, params)
    assert out2.shape == (N2, 1)
    assert jnp.allclose(out2, ref2, atol=1e-4, rtol=1e-5)

    print("KERNEL_OK")
</pallas_src>

<mosaic_0001>
module attributes {stable_mosaic.version = 11 : i64} {
  func.func @_depthnet4_kernel(%arg0: i32, %arg1: memref<256x128xf32, #tpu.memory_space<vmem>>, %arg2: memref<128x64xf32, #tpu.memory_space<vmem>>, %arg3: memref<1x64xf32, #tpu.memory_space<vmem>>, %arg4: memref<64x64xf32, #tpu.memory_space<vmem>>, %arg5: memref<1x64xf32, #tpu.memory_space<vmem>>, %arg6: memref<4x64xf32, #tpu.memory_space<vmem>>, %arg7: memref<1x1xf32, #tpu.memory_space<vmem>>, %arg8: memref<4x256xf32, #tpu.memory_space<vmem>>) attributes {dimension_semantics = [#tpu.dimension_semantics<parallel>], iteration_bounds = array<i64: 1>, scalar_prefetch = 0 : i64, scratch_operands = 0 : i64, tpu.core_type = #tpu.core_type<tc>, window_params = [{transform_indices = @transform_0, window_bounds = array<i64: 256, 128>}, {pipeline_mode = #tpu.pipeline_mode<synchronous>, transform_indices = @transform_1, window_bounds = array<i64: 128, 64>}, {pipeline_mode = #tpu.pipeline_mode<synchronous>, transform_indices = @transform_2, window_bounds = array<i64: 1, 64>}, {pipeline_mode = #tpu.pipeline_mode<synchronous>, transform_indices = @transform_3, window_bounds = array<i64: 64, 64>}, {pipeline_mode = #tpu.pipeline_mode<synchronous>, transform_indices = @transform_4, window_bounds = array<i64: 1, 64>}, {pipeline_mode = #tpu.pipeline_mode<synchronous>, transform_indices = @transform_5, window_bounds = array<i64: 4, 64>}, {pipeline_mode = #tpu.pipeline_mode<synchronous>, transform_indices = @transform_6, window_bounds = array<i64: 1, 1>}, {transform_indices = @transform_7, window_bounds = array<i64: 4, 256>}]} {
    %c0 = arith.constant 0 : index
    %c0_0 = arith.constant 0 : index
    %0 = vector.load %arg1[%c0, %c0_0] : memref<256x128xf32, #tpu.memory_space<vmem>>, vector<256x128xf32>
    %c0_1 = arith.constant 0 : index
    %c0_2 = arith.constant 0 : index
    %1 = vector.load %arg2[%c0_1, %c0_2] : memref<128x64xf32, #tpu.memory_space<vmem>>, vector<128x64xf32>
    %cst = arith.constant dense<0.000000e+00> : vector<256x64xf32>
    %2 = tpu.matmul %0, %1, %cst {dimension_numbers = #tpu.dot_dimension_numbers<[1], [0], [0], [1], [0, 0, 1, 1], [], []>} : vector<256x128xf32>, vector<128x64xf32>, vector<256x64xf32> -> vector<256x64xf32>
    %c0_3 = arith.constant 0 : index
    %c0_4 = arith.constant 0 : index
    %3 = vector.load %arg3[%c0_3, %c0_4] : memref<1x64xf32, #tpu.memory_space<vmem>>, vector<1x64xf32>
    %4 = vector.broadcast %3 : vector<1x64xf32> to vector<256x64xf32>
    %5 = arith.addf %2, %4 : vector<256x64xf32>
    %cst_5 = arith.constant 0.000000e+00 : f32
    %6 = vector.broadcast %cst_5 : f32 to vector<256x64xf32>
    %7 = arith.maximumf %5, %6 : vector<256x64xf32>
    %c0_6 = arith.constant 0 : index
    %c0_7 = arith.constant 0 : index
    %8 = vector.load %arg4[%c0_6, %c0_7] : memref<64x64xf32, #tpu.memory_space<vmem>>, vector<64x64xf32>
    %cst_8 = arith.constant dense<0.000000e+00> : vector<256x64xf32>
    %9 = tpu.matmul %7, %8, %cst_8 {dimension_numbers = #tpu.dot_dimension_numbers<[1], [0], [0], [1], [0, 0, 1, 1], [], []>} : vector<256x64xf32>, vector<64x64xf32>, vector<256x64xf32> -> vector<256x64xf32>
    %c0_9 = arith.constant 0 : index
    %c0_10 = arith.constant 0 : index
    %10 = vector.load %arg5[%c0_9, %c0_10] : memref<1x64xf32, #tpu.memory_space<vmem>>, vector<1x64xf32>
    %11 = vector.broadcast %10 : vector<1x64xf32> to vector<256x64xf32>
    %12 = arith.addf %9, %11 : vector<256x64xf32>
    %cst_11 = arith.constant 0.000000e+00 : f32
    %13 = vector.broadcast %cst_11 : f32 to vector<256x64xf32>
    %14 = arith.maximumf %12, %13 : vector<256x64xf32>
    %c0_12 = arith.constant 0 : index
    %c0_13 = arith.constant 0 : index
    %15 = vector.load %arg6[%c0_12, %c0_13] : memref<4x64xf32, #tpu.memory_space<vmem>>, vector<4x64xf32>
    %cst_14 = arith.constant dense<0.000000e+00> : vector<4x256xf32>
    %16 = tpu.matmul %15, %14, %cst_14 {dimension_numbers = #tpu.dot_dimension_numbers<[1], [1], [0], [0], [0, 0, 1, 0], [], []>} : vector<4x64xf32>, vector<256x64xf32>, vector<4x256xf32> -> vector<4x256xf32>
    %c0_15 = arith.constant 0 : index
    %c0_16 = arith.constant 0 : index
    %17 = vector.load %arg7[%c0_15, %c0_16] : memref<1x1xf32, #tpu.memory_space<vmem>>, vector<1x1xf32>
    %18 = vector.broadcast %17 : vector<1x1xf32> to vector<4x256xf32>
    %19 = arith.addf %16, %18 : vector<4x256xf32>
    %c0_17 = arith.constant 0 : index
    %c0_18 = arith.constant 0 : index
    %20 = vector.load %arg8[%c0_17, %c0_18] : memref<4x256xf32, #tpu.memory_space<vmem>>, vector<4x256xf32>
    tpu.vector_store %arg8[%c0_17, %c0_18], %19 {strides = array<i32>} : memref<4x256xf32, #tpu.memory_space<vmem>>, vector<4x256xf32>,
    return
  }
  func.func @transform_0(%arg0: i32) -> (i32, i32) {
    %c0_i32 = arith.constant 0 : i32
    %c0_i32_0 = arith.constant 0 : i32
    return %arg0, %c0_i32 : i32, i32
  }
  func.func @transform_1(%arg0: i32) -> (i32, i32) {
    %c0_i32 = arith.constant 0 : i32
    %c0_i32_0 = arith.constant 0 : i32
    %c0_i32_1 = arith.constant 0 : i32
    return %c0_i32, %c0_i32_0 : i32, i32
  }
  func.func @transform_2(%arg0: i32) -> (i32, i32) {
    %c0_i32 = arith.constant 0 : i32
    %c0_i32_0 = arith.constant 0 : i32
    %c0_i32_1 = arith.constant 0 : i32
    return %c0_i32, %c0_i32_0 : i32, i32
  }
  func.func @transform_3(%arg0: i32) -> (i32, i32) {
    %c0_i32 = arith.constant 0 : i32
    %c0_i32_0 = arith.constant 0 : i32
    %c0_i32_1 = arith.constant 0 : i32
    return %c0_i32, %c0_i32_0 : i32, i32
  }
  func.func @transform_4(%arg0: i32) -> (i32, i32) {
    %c0_i32 = arith.constant 0 : i32
    %c0_i32_0 = arith.constant 0 : i32
    %c0_i32_1 = arith.constant 0 : i32
    return %c0_i32, %c0_i32_0 : i32, i32
  }
  func.func @transform_5(%arg0: i32) -> (i32, i32) {
    %c0_i32 = arith.constant 0 : i32
    %c0_i32_0 = arith.constant 0 : i32
    %c0_i32_1 = arith.constant 0 : i32
    return %c0_i32, %c0_i32_0 : i32, i32
  }
  func.func @transform_6(%arg0: i32) -> (i32, i32) {
    %c0_i32 = arith.constant 0 : i32
    %c0_i32_0 = arith.constant 0 : i32
    %c0_i32_1 = arith.constant 0 : i32
    return %c0_i32, %c0_i32_0 : i32, i32
  }
  func.func @transform_7(%arg0: i32) -> (i32, i32) {
    %c0_i32 = arith.constant 0 : i32
    %c0_i32_0 = arith.constant 0 : i32
    return %c0_i32, %arg0 : i32, i32
  }
}

</mosaic_0001>

<llo_original>
// kernel: tpu_custom_call.1
$region0: #{tpu_custom_call.1}
  #allocation0 [shape = 'u32[]', space=smem, size = 0x4, offset = 0x4, fixed_abs, tag = 'smem constant byte address 0x4 - core index']
  #allocation1 [shape = 'u32[144,128]{1,0:T(1,128)}', space=vmem, size = 0x12000, scoped, tag = 'internal scratch']
  #allocation2 [shape = 'f32[1,1]{1,0:T(1,128)S(1)}', space=vmem, size = 0x200, scoped, tag = 'scoped memory for tpu_custom_call.1']
  %s0 = inlined_call_operand.hbm [shape: f32[256,128], index: 0, kind: input, shape index: {}]
  %s1 = inlined_call_operand.vmem [shape: f32[128,64], index: 1, kind: input, shape index: {}]
  %s2 = inlined_call_operand.vmem [shape: f32[1,64], index: 2, kind: input, shape index: {}]
  %s3 = inlined_call_operand.vmem [shape: f32[64,64], index: 3, kind: input, shape index: {}]
  %s4 = inlined_call_operand.vmem [shape: f32[1,64], index: 4, kind: input, shape index: {}]
  %s5 = inlined_call_operand.vmem [shape: f32[4,64], index: 5, kind: input, shape index: {}]
  %s6 = inlined_call_operand.<no memory space> [shape: f32[1,1], index: 6, kind: input, shape index: {}]
  %s7 = inlined_call_operand.hbm [shape: f32[4,256], index: 7, kind: output, shape index: {}]
  %s8 = sld [smem:[#allocation0]]
  $region42: #{tpu_custom_call.1} parent=0
    _
  %s10 = ssub.s32 1, %s8
  %s11 = scalar_select 0, %s10, %s8
  %v12 = vstv %s6
  %13 = vst [vmem:[#allocation2] sm:$0x1] %v12
  $region1: #{tpu_custom_call.1} parent=0
    #allocation3 [shape = 'u8[131072]{0}', space=vmem, size = 0x20000, scoped, tag = 'input window, operand 0, single buffered']
    #allocation4 [shape = 's32[1]{0}', space=sflag, size = 0x4, scoped, tag = 'scoped memory for tpu_custom_call.1']
    #allocation5 [shape = 's32[1]{0}', space=sflag, size = 0x4, scoped, tag = 'scoped memory for tpu_custom_call.1']
    #allocation6 [shape = 'u8[4096]{0}', space=vmem, size = 0x1000, scoped, tag = 'output window, operand 0, single buffered']
    %14 = vsyncpa [#allocation4], 0
    %15 = vsyncpa [#allocation5], 0
    // Predicated region
    $region2: #{tpu_custom_call.1} parent=1 // pred_check
      _
    $region3: #{tpu_custom_call.1} parent=1 // pred_check_branch
      %17 = sbr.rel (0) target = $region5
    $region4: #{tpu_custom_call.1} parent=1 // pred_region
      %s19 = ssub.s32 4096, 4096
      %20 = vsyncadd [#allocation4], %s19
      %s21 = sshll.u32 [#allocation3], 4
      %s22 = int_to_ptr.vmem [resolvable:$true] %s21
      %27 = dma.hbm_to_vmem [thread:$0]  %s0, 4096, %s22, [#allocation4], 128, 128, 8
    $region5: #{tpu_custom_call.1} parent=1 // pred_fallthru
      _
    // Predicated region
    $region6: #{tpu_custom_call.1} parent=1 // pred_check
      _
    $region7: #{tpu_custom_call.1} parent=1 // pred_check_branch
      %29 = sbr.rel (0) target = $region9
    $region8: #{tpu_custom_call.1} parent=1 // pred_region
      _
    $region9: #{tpu_custom_call.1} parent=1 // pred_fallthru
      _
    // Predicated region
    $region10: #{tpu_custom_call.1} parent=1 // pred_check
      _
    $region11: #{tpu_custom_call.1} parent=1 // pred_check_branch
      %31 = sbr.rel (0) target = $region13
    $region12: #{tpu_custom_call.1} parent=1 // pred_region
      _
    $region13: #{tpu_custom_call.1} parent=1 // pred_fallthru
      _
    // Predicated region
    $region14: #{tpu_custom_call.1} parent=1 // pred_check
      _
    $region15: #{tpu_custom_call.1} parent=1 // pred_check_branch
      %33 = sbr.rel (0) target = $region17
    $region16: #{tpu_custom_call.1} parent=1 // pred_region
      _
    $region17: #{tpu_custom_call.1} parent=1 // pred_fallthru
      _
    // Predicated region
    $region18: #{tpu_custom_call.1} parent=1 // pred_check
      _
    $region19: #{tpu_custom_call.1} parent=1 // pred_check_branch
      %35 = sbr.rel (0) target = $region21
    $region20: #{tpu_custom_call.1} parent=1 // pred_region
      _
    $region21: #{tpu_custom_call.1} parent=1 // pred_fallthru
      _
    // Predicated region
    $region22: #{tpu_custom_call.1} parent=1 // pred_check
      _
    $region23: #{tpu_custom_call.1} parent=1 // pred_check_branch
      %37 = sbr.rel (0) target = $region25
    $region24: #{tpu_custom_call.1} parent=1 // pred_region
      _
    $region25: #{tpu_custom_call.1} parent=1 // pred_fallthru
      _
    // Predicated region
    $region26: #{tpu_custom_call.1} parent=1 // pred_check
      _
    $region27: #{tpu_custom_call.1} parent=1 // pred_check_branch
      %39 = sbr.rel (0) target = $region29
    $region28: #{tpu_custom_call.1} parent=1 // pred_region
      _
    $region29: #{tpu_custom_call.1} parent=1 // pred_fallthru
      _
    // Predicated region
    $region30: #{tpu_custom_call.1} parent=1 // pred_check
      _
    $region31: #{tpu_custom_call.1} parent=1 // pred_check_branch
      %41 = sbr.rel (0) target = $region33
    $region32: #{tpu_custom_call.1} parent=1 // pred_region
      %42 = dma.done [#allocation4], 4096
    $region33: #{tpu_custom_call.1} parent=1 // pred_fallthru
      _
    %v43 = vld [vmem:[#allocation3] sm:$0xff]
    %v44 = vld [vmem:[#allocation3 + $0x8] sm:$0xff]
    %v45 = vld [vmem:[#allocation3 + $0x10] sm:$0xff]
    %v46 = vld [vmem:[#allocation3 + $0x18] sm:$0xff]
    %v47 = vld [vmem:[#allocation3 + $0x20] sm:$0xff]
    %v48 = vld [vmem:[#allocation3 + $0x28] sm:$0xff]
    %v49 = vld [vmem:[#allocation3 + $0x30] sm:$0xff]
    %v50 = vld [vmem:[#allocation3 + $0x38] sm:$0xff]
    %v51 = vld [vmem:[#allocation3 + $0x40] sm:$0xff]
    %v52 = vld [vmem:[#allocation3 + $0x48] sm:$0xff]
    %v53 = vld [vmem:[#allocation3 + $0x50] sm:$0xff]
    %v54 = vld [vmem:[#allocation3 + $0x58] sm:$0xff]
    %v55 = vld [vmem:[#allocation3 + $0x60] sm:$0xff]
    %v56 = vld [vmem:[#allocation3 + $0x68] sm:$0xff]
    %v57 = vld [vmem:[#allocation3 + $0x70] sm:$0xff]
    %v58 = vld [vmem:[#allocation3 + $0x78] sm:$0xff]
    %v59 = vld [vmem:[#allocation3 + $0x80] sm:$0xff]
    %v60 = vld [vmem:[#allocation3 + $0x88] sm:$0xff]
    %v61 = vld [vmem:[#allocation3 + $0x90] sm:$0xff]
    %v62 = vld [vmem:[#allocation3 + $0x98] sm:$0xff]
    %v63 = vld [vmem:[#allocation3 + $0xa0] sm:$0xff]
    %v64 = vld [vmem:[#allocation3 + $0xa8] sm:$0xff]
    %v65 = vld [vmem:[#allocation3 + $0xb0] sm:$0xff]
    %v66 = vld [vmem:[#allocation3 + $0xb8] sm:$0xff]
    %v67 = vld [vmem:[#allocation3 + $0xc0] sm:$0xff]
    %v68 = vld [vmem:[#allocation3 + $0xc8] sm:$0xff]
    %v69 = vld [vmem:[#allocation3 + $0xd0] sm:$0xff]
    %v70 = vld [vmem:[#allocation3 + $0xd8] sm:$0xff]
    %v71 = vld [vmem:[#allocation3 + $0xe0] sm:$0xff]
    %v72 = vld [vmem:[#allocation3 + $0xe8] sm:$0xff]
    %v73 = vld [vmem:[#allocation3 + $0xf0] sm:$0xff]
    %v74 = vld [vmem:[#allocation3 + $0xf8] sm:$0xff]
    %v75 = vld [vmem:[%s1] sm:$0xff]
    %v76 = vld [vmem:[%s1 + $0x8] sm:$0xff]
    %v77 = vld [vmem:[%s1 + $0x10] sm:$0xff]
    %v78 = vld [vmem:[%s1 + $0x18] sm:$0xff]
    %v79 = vld [vmem:[%s1 + $0x20] sm:$0xff]
    %v80 = vld [vmem:[%s1 + $0x28] sm:$0xff]
    %v81 = vld [vmem:[%s1 + $0x30] sm:$0xff]
    %v82 = vld [vmem:[%s1 + $0x38] sm:$0xff]
    %v83 = vld [vmem:[%s1 + $0x40] sm:$0xff]
    %v84 = vld [vmem:[%s1 + $0x48] sm:$0xff]
    %v85 = vld [vmem:[%s1 + $0x50] sm:$0xff]
    %v86 = vld [vmem:[%s1 + $0x58] sm:$0xff]
    %v87 = vld [vmem:[%s1 + $0x60] sm:$0xff]
    %v88 = vld [vmem:[%s1 + $0x68] sm:$0xff]
    %v89 = vld [vmem:[%s1 + $0x70] sm:$0xff]
    %v90 = vld [vmem:[%s1 + $0x78] sm:$0xff]
    %v91 = vld [vmem:[%s2] sm:$0x1]
    %v93 = vlaneseq
    %v94 = vshrl.u32 %v93, 7
    %v95 = vsub.s32 0, %v94
    %v96 = vrot.slane %v91, %v95
    %98 = vmatprep.subr.mxu0 0.0
    %99 = vmatpush1.msra.mxu0 %v75
    %100 = vmatprep.subr.mxu0 0.0
    %101 = vmatpush1.msra.mxu0 %v76
    %102 = vmatprep.subr.mxu0 0.0
    %103 = vmatpush1.msra.mxu0 %v77
    %104 = vmatprep.subr.mxu0 0.0
    %105 = vmatpush1.msra.mxu0 %v78
    %106 = vmatprep.subr.mxu0 0.0
    %107 = vmatpush1.msra.mxu0 %v79
    %108 = vmatprep.subr.mxu0 0.0
    %109 = vmatpush1.msra.mxu0 %v80
    %110 = vmatprep.subr.mxu0 0.0
    %111 = vmatpush1.msra.mxu0 %v81
    %112 = vmatprep.subr.mxu0 0.0
    %113 = vmatpush1.msra.mxu0 %v82
    %114 = vmatprep.subr.mxu0 0.0
    %115 = vmatpush1.msra.mxu0 %v83
    %116 = vmatprep.subr.mxu0 0.0
    %117 = vmatpush1.msra.mxu0 %v84
    %118 = vmatprep.subr.mxu0 0.0
    %119 = vmatpush1.msra.mxu0 %v85
    %120 = vmatprep.subr.mxu0 0.0
    %121 = vmatpush1.msra.mxu0 %v86
    %122 = vmatprep.subr.mxu0 0.0
    %123 = vmatpush1.msra.mxu0 %v87
    %124 = vmatprep.subr.mxu0 0.0
    %125 = vmatpush1.msra.mxu0 %v88
    %126 = vmatprep.subr.mxu0 0.0
    %127 = vmatpush1.msra.mxu0 %v89
    %128 = vmatprep.subr.mxu0 0.0
    %129 = vmatpush1.msra.mxu0 %v90
    %130 = vmatprep.subr.mxu0 0.0
    %131 = vmatpush1.msra.mxu0 0.0
    %132 = vmatprep.subr.mxu0 0.0
    %133 = vmatpush1.msra.mxu0 0.0
    %134 = vmatprep.subr.mxu0 0.0
    %135 = vmatpush1.msra.mxu0 0.0
    %136 = vmatprep.subr.mxu0 0.0
    %137 = vmatpush1.msra.mxu0 0.0
    %138 = vmatprep.subr.mxu0 0.0
    %139 = vmatpush1.msra.mxu0 0.0
    %140 = vmatprep.subr.mxu0 0.0
    %141 = vmatpush1.msra.mxu0 0.0
    %142 = vmatprep.subr.mxu0 0.0
    %143 = vmatpush1.msra.mxu0 0.0
    %144 = vmatprep.subr.mxu0 0.0
    %145 = vmatpush1.msra.mxu0 0.0
    %146 = vmatprep.subr.mxu0 0.0
    %147 = vmatpush1.msra.mxu0 0.0
    %148 = vmatprep.subr.mxu0 0.0
    %149 = vmatpush1.msra.mxu0 0.0
    %150 = vmatprep.subr.mxu0 0.0
    %151 = vmatpush1.msra.mxu0 0.0
    %152 = vmatprep.subr.mxu0 0.0
    %153 = vmatpush1.msra.mxu0 0.0
    %154 = vmatprep.subr.mxu0 0.0
    %155 = vmatpush1.msra.mxu0 0.0
    %156 = vmatprep.subr.mxu0 0.0
    %157 = vmatpush1.msra.mxu0 0.0
    %158 = vmatprep.subr.mxu0 0.0
    %159 = vmatpush1.msra.mxu0 0.0
    %160 = vmatprep.subr.mxu0 0.0
    %161 = vmatpush1.msra.mxu0 0.0
    %162 = vmatprep.mubr.f32.mxu0 0.0
    %163 = vmatmul.mubr.f32.gmra.mrb[0].mxu0 %v43
    %v164 = vpop.f32.mrb[0].mxu0
    %v165 = vadd.f32 %v96, %v164
    %v166 = vpop.f32.mrb[0].mxu0
    %167 = vmatprep.mubr.f32.mxu0 0.0
    %168 = vmatmul.mubr.f32.gmra.mrb[0].mxu0 %v44
    %v169 = vpop.f32.mrb[0].mxu0
    %v170 = vadd.f32 %v96, %v169
    %v171 = vpop.f32.mrb[0].mxu0
    %172 = vmatprep.mubr.f32.mxu0 0.0
    %173 = vmatmul.mubr.f32.gmra.mrb[0].mxu0 %v45
    %v174 = vpop.f32.mrb[0].mxu0
    %v175 = vadd.f32 %v96, %v174
    %v176 = vpop.f32.mrb[0].mxu0
    %177 = vmatprep.mubr.f32.mxu0 0.0
    %178 = vmatmul.mubr.f32.gmra.mrb[0].mxu0 %v46
    %v179 = vpop.f32.mrb[0].mxu0
    %v180 = vadd.f32 %v96, %v179
    %v181 = vpop.f32.mrb[0].mxu0
    %182 = vmatprep.mubr.f32.mxu0 0.0
    %183 = vmatmul.mubr.f32.gmra.mrb[0].mxu0 %v47
    %v184 = vpop.f32.mrb[0].mxu0
    %v185 = vadd.f32 %v96, %v184
    %v186 = vpop.f32.mrb[0].mxu0
    %187 = vmatprep.mubr.f32.mxu0 0.0
    %188 = vmatmul.mubr.f32.gmra.mrb[0].mxu0 %v48
    %v189 = vpop.f32.mrb[0].mxu0
    %v190 = vadd.f32 %v96, %v189
    %v191 = vpop.f32.mrb[0].mxu0
    %192 = vmatprep.mubr.f32.mxu0 0.0
    %193 = vmatmul.mubr.f32.gmra.mrb[0].mxu0 %v49
    %v194 = vpop.f32.mrb[0].mxu0
    %v195 = vadd.f32 %v96, %v194
    %v196 = vpop.f32.mrb[0].mxu0
    %197 = vmatprep.mubr.f32.mxu0 0.0
    %198 = vmatmul.mubr.f32.gmra.mrb[0].mxu0 %v50
    %v199 = vpop.f32.mrb[0].mxu0
    %v200 = vadd.f32 %v96, %v199
    %v201 = vpop.f32.mrb[0].mxu0
    %202 = vmatprep.mubr.f32.mxu0 0.0
    %203 = vmatmul.mubr.f32.gmra.mrb[0].mxu0 %v51
    %v204 = vpop.f32.mrb[0].mxu0
    %v205 = vadd.f32 %v96, %v204
    %v206 = vpop.f32.mrb[0].mxu0
    %207 = vmatprep.mubr.f32.mxu0 0.0
    %208 = vmatmul.mubr.f32.gmra.mrb[0].mxu0 %v52
    %v209 = vpop.f32.mrb[0].mxu0
    %v210 = vadd.f32 %v96, %v209
    %v211 = vpop.f32.mrb[0].mxu0
    %212 = vmatprep.mubr.f32.mxu0 0.0
    %213 = vmatmul.mubr.f32.gmra.mrb[0].mxu0 %v53
    %v214 = vpop.f32.mrb[0].mxu0
    %v215 = vadd.f32 %v96, %v214
    %v216 = vpop.f32.mrb[0].mxu0
    %217 = vmatprep.mubr.f32.mxu0 0.0
    %218 = vmatmul.mubr.f32.gmra.mrb[0].mxu0 %v54
    %v219 = vpop.f32.mrb[0].mxu0
    %v220 = vadd.f32 %v96, %v219
    %v221 = vpop.f32.mrb[0].mxu0
    %222 = vmatprep.mubr.f32.mxu0 0.0
    %223 = vmatmul.mubr.f32.gmra.mrb[0].mxu0 %v55
    %v224 = vpop.f32.mrb[0].mxu0
    %v225 = vadd.f32 %v96, %v224
    %v226 = vpop.f32.mrb[0].mxu0
    %227 = vmatprep.mubr.f32.mxu0 0.0
    %228 = vmatmul.mubr.f32.gmra.mrb[0].mxu0 %v56
    %v229 = vpop.f32.mrb[0].mxu0
    %v230 = vadd.f32 %v96, %v229
    %v231 = vpop.f32.mrb[0].mxu0
    %232 = vmatprep.mubr.f32.mxu0 0.0
    %233 = vmatmul.mubr.f32.gmra.mrb[0].mxu0 %v57
    %v234 = vpop.f32.mrb[0].mxu0
    %v235 = vadd.f32 %v96, %v234
    %v236 = vpop.f32.mrb[0].mxu0
    %237 = vmatprep.mubr.f32.mxu0 0.0
    %238 = vmatmul.mubr.f32.gmra.mrb[0].mxu0 %v58
    %v239 = vpop.f32.mrb[0].mxu0
    %v240 = vadd.f32 %v96, %v239
    %v241 = vpop.f32.mrb[0].mxu0
    %242 = vmatprep.mubr.f32.mxu0 0.0
    %243 = vmatmul.mubr.f32.gmra.mrb[0].mxu0 %v59
    %v244 = vpop.f32.mrb[0].mxu0
    %v245 = vadd.f32 %v96, %v244
    %v246 = vpop.f32.mrb[0].mxu0
    %247 = vmatprep.mubr.f32.mxu0 0.0
    %248 = vmatmul.mubr.f32.gmra.mrb[0].mxu0 %v60
    %v249 = vpop.f32.mrb[0].mxu0
    %v250 = vadd.f32 %v96, %v249
    %v251 = vpop.f32.mrb[0].mxu0
    %252 = vmatprep.mubr.f32.mxu0 0.0
    %253 = vmatmul.mubr.f32.gmra.mrb[0].mxu0 %v61
    %v254 = vpop.f32.mrb[0].mxu0
    %v255 = vadd.f32 %v96, %v254
    %v256 = vpop.f32.mrb[0].mxu0
    %257 = vmatprep.mubr.f32.mxu0 0.0
    %258 = vmatmul.mubr.f32.gmra.mrb[0].mxu0 %v62
    %v259 = vpop.f32.mrb[0].mxu0
    %v260 = vadd.f32 %v96, %v259
    %v261 = vpop.f32.mrb[0].mxu0
    %262 = vmatprep.mubr.f32.mxu0 0.0
    %263 = vmatmul.mubr.f32.gmra.mrb[0].mxu0 %v63
    %v264 = vpop.f32.mrb[0].mxu0
    %v265 = vadd.f32 %v96, %v264
    %v266 = vpop.f32.mrb[0].mxu0
    %267 = vmatprep.mubr.f32.mxu0 0.0
    %268 = vmatmul.mubr.f32.gmra.mrb[0].mxu0 %v64
    %v269 = vpop.f32.mrb[0].mxu0
    %v270 = vadd.f32 %v96, %v269
    %v271 = vpop.f32.mrb[0].mxu0
    %272 = vmatprep.mubr.f32.mxu0 0.0
    %273 = vmatmul.mubr.f32.gmra.mrb[0].mxu0 %v65
    %v274 = vpop.f32.mrb[0].mxu0
    %v275 = vadd.f32 %v96, %v274
    %v276 = vpop.f32.mrb[0].mxu0
    %277 = vmatprep.mubr.f32.mxu0 0.0
    %278 = vmatmul.mubr.f32.gmra.mrb[0].mxu0 %v66
    %v279 = vpop.f32.mrb[0].mxu0
    %v280 = vadd.f32 %v96, %v279
    %v281 = vpop.f32.mrb[0].mxu0
    %282 = vmatprep.mubr.f32.mxu0 0.0
    %283 = vmatmul.mubr.f32.gmra.mrb[0].mxu0 %v67
    %v284 = vpop.f32.mrb[0].mxu0
    %v285 = vadd.f32 %v96, %v284
    %v286 = vpop.f32.mrb[0].mxu0
    %287 = vmatprep.mubr.f32.mxu0 0.0
    %288 = vmatmul.mubr.f32.gmra.mrb[0].mxu0 %v68
    %v289 = vpop.f32.mrb[0].mxu0
    %v290 = vadd.f32 %v96, %v289
    %v291 = vpop.f32.mrb[0].mxu0
    %292 = vmatprep.mubr.f32.mxu0 0.0
    %293 = vmatmul.mubr.f32.gmra.mrb[0].mxu0 %v69
    %v294 = vpop.f32.mrb[0].mxu0
    %v295 = vadd.f32 %v96, %v294
    %v296 = vpop.f32.mrb[0].mxu0
    %297 = vmatprep.mubr.f32.mxu0 0.0
    %298 = vmatmul.mubr.f32.gmra.mrb[0].mxu0 %v70
    %v299 = vpop.f32.mrb[0].mxu0
    %v300 = vadd.f32 %v96, %v299
    %v301 = vpop.f32.mrb[0].mxu0
    %302 = vmatprep.mubr.f32.mxu0 0.0
    %303 = vmatmul.mubr.f32.gmra.mrb[0].mxu0 %v71
    %v304 = vpop.f32.mrb[0].mxu0
    %v305 = vadd.f32 %v96, %v304
    %v306 = vpop.f32.mrb[0].mxu0
    %307 = vmatprep.mubr.f32.mxu0 0.0
    %308 = vmatmul.mubr.f32.gmra.mrb[0].mxu0 %v72
    %v309 = vpop.f32.mrb[0].mxu0
    %v310 = vadd.f32 %v96, %v309
    %v311 = vpop.f32.mrb[0].mxu0
    %312 = vmatprep.mubr.f32.mxu0 0.0
    %313 = vmatmul.mubr.f32.gmra.mrb[0].mxu0 %v73
    %v314 = vpop.f32.mrb[0].mxu0
    %v315 = vadd.f32 %v96, %v314
    %v316 = vpop.f32.mrb[0].mxu0
    %317 = vmatprep.mubr.f32.mxu0 0.0
    %318 = vmatmul.mubr.f32.gmra.mrb[0].mxu0 %v74
    %v319 = vpop.f32.mrb[0].mxu0
    %v320 = vadd.f32 %v96, %v319
    %v321 = vpop.f32.mrb[0].mxu0
    %322 = vdwg.mxu0
    %v323 = vmax.f32 %v165, 0.0
    %v324 = vmax.f32 %v170, 0.0
    %v325 = vmax.f32 %v175, 0.0
    %v326 = vmax.f32 %v180, 0.0
    %v327 = vmax.f32 %v185, 0.0
    %v328 = vmax.f32 %v190, 0.0
    %v329 = vmax.f32 %v195, 0.0
    %v330 = vmax.f32 %v200, 0.0
    %v331 = vmax.f32 %v205, 0.0
    %v332 = vmax.f32 %v210, 0.0
    %v333 = vmax.f32 %v215, 0.0
    %v334 = vmax.f32 %v220, 0.0
    %v335 = vmax.f32 %v225, 0.0
    %v336 = vmax.f32 %v230, 0.0
    %v337 = vmax.f32 %v235, 0.0
    %v338 = vmax.f32 %v240, 0.0
    %v339 = vmax.f32 %v245, 0.0
    %v340 = vmax.f32 %v250, 0.0
    %v341 = vmax.f32 %v255, 0.0
    %v342 = vmax.f32 %v260, 0.0
    %v343 = vmax.f32 %v265, 0.0
    %v344 = vmax.f32 %v270, 0.0
    %v345 = vmax.f32 %v275, 0.0
    %v346 = vmax.f32 %v280, 0.0
    %v347 = vmax.f32 %v285, 0.0
    %v348 = vmax.f32 %v290, 0.0
    %v349 = vmax.f32 %v295, 0.0
    %v350 = vmax.f32 %v300, 0.0
    %v351 = vmax.f32 %v305, 0.0
    %v352 = vmax.f32 %v310, 0.0
    %v353 = vmax.f32 %v315, 0.0
    %v354 = vmax.f32 %v320, 0.0
    %v355 = vld [vmem:[%s3] sm:$0xff]
    %v356 = vld [vmem:[%s3 + $0x8] sm:$0xff]
    %v357 = vld [vmem:[%s3 + $0x10] sm:$0xff]
    %v358 = vld [vmem:[%s3 + $0x18] sm:$0xff]
    %v359 = vld [vmem:[%s3 + $0x20] sm:$0xff]
    %v360 = vld [vmem:[%s3 + $0x28] sm:$0xff]
    %v361 = vld [vmem:[%s3 + $0x30] sm:$0xff]
    %v362 = vld [vmem:[%s3 + $0x38] sm:$0xff]
    %v363 = vld [vmem:[%s4] sm:$0x1]
    %v365 = vlaneseq
    %v366 = vshrl.u32 %v365, 7
    %v367 = vsub.s32 0, %v366
    %v368 = vrot.slane %v363, %v367
    %vm370 = vcmask 523264
    %v372 = vsel %vm370, %v323, 0
    %v375 = vsel %vm370, %v324, 0
    %v378 = vsel %vm370, %v325, 0
    %v381 = vsel %vm370, %v326, 0
    %v384 = vsel %vm370, %v327, 0
    %v387 = vsel %vm370, %v328, 0
    %v390 = vsel %vm370, %v329, 0
    %v393 = vsel %vm370, %v330, 0
    %v396 = vsel %vm370, %v331, 0
    %v399 = vsel %vm370, %v332, 0
    %v402 = vsel %vm370, %v333, 0
    %v405 = vsel %vm370, %v334, 0
    %v408 = vsel %vm370, %v335, 0
    %v411 = vsel %vm370, %v336, 0
    %v414 = vsel %vm370, %v337, 0
    %v417 = vsel %vm370, %v338, 0
    %v420 = vsel %vm370, %v339, 0
    %v423 = vsel %vm370, %v340, 0
    %v426 = vsel %vm370, %v341, 0
    %v429 = vsel %vm370, %v342, 0
    %v432 = vsel %vm370, %v343, 0
    %v435 = vsel %vm370, %v344, 0
    %v438 = vsel %vm370, %v345, 0
    %v441 = vsel %vm370, %v346, 0
    %v444 = vsel %vm370, %v347, 0
    %v447 = vsel %vm370, %v348, 0
    %v450 = vsel %vm370, %v349, 0
    %v453 = vsel %vm370, %v350, 0
    %v456 = vsel %vm370, %v351, 0
    %v459 = vsel %vm370, %v352, 0
    %v462 = vsel %vm370, %v353, 0
    %v465 = vsel %vm370, %v354, 0
    %467 = vmatprep.subr.mxu0 0.0
    %468 = vmatpush1.msra.mxu0 %v355
    %469 = vmatprep.subr.mxu0 0.0
    %470 = vmatpush1.msra.mxu0 %v356
    %471 = vmatprep.subr.mxu0 0.0
    %472 = vmatpush1.msra.mxu0 %v357
    %473 = vmatprep.subr.mxu0 0.0
    %474 = vmatpush1.msra.mxu0 %v358
    %475 = vmatprep.subr.mxu0 0.0
    %476 = vmatpush1.msra.mxu0 %v359
    %477 = vmatprep.subr.mxu0 0.0
    %478 = vmatpush1.msra.mxu0 %v360
    %479 = vmatprep.subr.mxu0 0.0
    %480 = vmatpush1.msra.mxu0 %v361
    %481 = vmatprep.subr.mxu0 0.0
    %482 = vmatpush1.msra.mxu0 %v362
    %483 = vmatprep.subr.mxu0 0.0
    %484 = vmatpush1.msra.mxu0 0.0
    %485 = vmatprep.subr.mxu0 0.0
    %486 = vmatpush1.msra.mxu0 0.0
    %487 = vmatprep.subr.mxu0 0.0
    %488 = vmatpush1.msra.mxu0 0.0
    %489 = vmatprep.subr.mxu0 0.0
    %490 = vmatpush1.msra.mxu0 0.0
    %491 = vmatprep.subr.mxu0 0.0
    %492 = vmatpush1.msra.mxu0 0.0
    %493 = vmatprep.subr.mxu0 0.0
    %494 = vmatpush1.msra.mxu0 0.0
    %495 = vmatprep.subr.mxu0 0.0
    %496 = vmatpush1.msra.mxu0 0.0
    %497 = vmatprep.subr.mxu0 0.0
    %498 = vmatpush1.msra.mxu0 0.0
    %499 = vmatprep.subr.mxu0 0.0
    %500 = vmatpush1.msra.mxu0 0.0
    %501 = vmatprep.subr.mxu0 0.0
    %502 = vmatpush1.msra.mxu0 0.0
    %503 = vmatprep.subr.mxu0 0.0
    %504 = vmatpush1.msra.mxu0 0.0
    %505 = vmatprep.subr.mxu0 0.0
    %506 = vmatpush1.msra.mxu0 0.0
    %507 = vmatprep.subr.mxu0 0.0
    %508 = vmatpush1.msra.mxu0 0.0
    %509 = vmatprep.subr.mxu0 0.0
    %510 = vmatpush1.msra.mxu0 0.0
    %511 = vmatprep.subr.mxu0 0.0
    %512 = vmatpush1.msra.mxu0 0.0
    %513 = vmatprep.subr.mxu0 0.0
    %514 = vmatpush1.msra.mxu0 0.0
    %515 = vmatprep.subr.mxu0 0.0
    %516 = vmatpush1.msra.mxu0 0.0
    %517 = vmatprep.subr.mxu0 0.0
    %518 = vmatpush1.msra.mxu0 0.0
    %519 = vmatprep.subr.mxu0 0.0
    %520 = vmatpush1.msra.mxu0 0.0
    %521 = vmatprep.subr.mxu0 0.0
    %522 = vmatpush1.msra.mxu0 0.0
    %523 = vmatprep.subr.mxu0 0.0
    %524 = vmatpush1.msra.mxu0 0.0
    %525 = vmatprep.subr.mxu0 0.0
    %526 = vmatpush1.msra.mxu0 0.0
    %527 = vmatprep.subr.mxu0 0.0
    %528 = vmatpush1.msra.mxu0 0.0
    %529 = vmatprep.subr.mxu0 0.0
    %530 = vmatpush1.msra.mxu0 0.0
    %531 = vmatprep.mubr.f32.mxu0 0.0
    %532 = vmatmul.mubr.f32.gmra.mrb[0].mxu0 %v372
    %v533 = vpop.f32.mrb[0].mxu0
    %v534 = vadd.f32 %v368, %v533
    %v535 = vpop.f32.mrb[0].mxu0
    %536 = vmatprep.mubr.f32.mxu0 0.0
    %537 = vmatmul.mubr.f32.gmra.mrb[0].mxu0 %v375
    %v538 = vpop.f32.mrb[0].mxu0
    %v539 = vadd.f32 %v368, %v538
    %v540 = vpop.f32.mrb[0].mxu0
    %541 = vmatprep.mubr.f32.mxu0 0.0
    %542 = vmatmul.mubr.f32.gmra.mrb[0].mxu0 %v378
    %v543 = vpop.f32.mrb[0].mxu0
    %v544 = vadd.f32 %v368, %v543
    %v545 = vpop.f32.mrb[0].mxu0
    %546 = vmatprep.mubr.f32.mxu0 0.0
    %547 = vmatmul.mubr.f32.gmra.mrb[0].mxu0 %v381
    %v548 = vpop.f32.mrb[0].mxu0
    %v549 = vadd.f32 %v368, %v548
    %v550 = vpop.f32.mrb[0].mxu0
    %551 = vmatprep.mubr.f32.mxu0 0.0
    %552 = vmatmul.mubr.f32.gmra.mrb[0].mxu0 %v384
    %v553 = vpop.f32.mrb[0].mxu0
    %v554 = vadd.f32 %v368, %v553
    %v555 = vpop.f32.mrb[0].mxu0
    %556 = vmatprep.mubr.f32.mxu0 0.0
    %557 = vmatmul.mubr.f32.gmra.mrb[0].mxu0 %v387
    %v558 = vpop.f32.mrb[0].mxu0
    %v559 = vadd.f32 %v368, %v558
    %v560 = vpop.f32.mrb[0].mxu0
    %561 = vmatprep.mubr.f32.mxu0 0.0
    %562 = vmatmul.mubr.f32.gmra.mrb[0].mxu0 %v390
    %v563 = vpop.f32.mrb[0].mxu0
    %v564 = vadd.f32 %v368, %v563
    %v565 = vpop.f32.mrb[0].mxu0
    %566 = vmatprep.mubr.f32.mxu0 0.0
    %567 = vmatmul.mubr.f32.gmra.mrb[0].mxu0 %v393
    %v568 = vpop.f32.mrb[0].mxu0
    %v569 = vadd.f32 %v368, %v568
    %v570 = vpop.f32.mrb[0].mxu0
    %571 = vmatprep.mubr.f32.mxu0 0.0
    %572 = vmatmul.mubr.f32.gmra.mrb[0].mxu0 %v396
    %v573 = vpop.f32.mrb[0].mxu0
    %v574 = vadd.f32 %v368, %v573
    %v575 = vpop.f32.mrb[0].mxu0
    %576 = vmatprep.mubr.f32.mxu0 0.0
    %577 = vmatmul.mubr.f32.gmra.mrb[0].mxu0 %v399
    %v578 = vpop.f32.mrb[0].mxu0
    %v579 = vadd.f32 %v368, %v578
    %v580 = vpop.f32.mrb[0].mxu0
    %581 = vmatprep.mubr.f32.mxu0 0.0
    %582 = vmatmul.mubr.f32.gmra.mrb[0].mxu0 %v402
    %v583 = vpop.f32.mrb[0].mxu0
    %v584 = vadd.f32 %v368, %v583
    %v585 = vpop.f32.mrb[0].mxu0
    %586 = vmatprep.mubr.f32.mxu0 0.0
    %587 = vmatmul.mubr.f32.gmra.mrb[0].mxu0 %v405
    %v588 = vpop.f32.mrb[0].mxu0
    %v589 = vadd.f32 %v368, %v588
    %v590 = vpop.f32.mrb[0].mxu0
    %591 = vmatprep.mubr.f32.mxu0 0.0
    %592 = vmatmul.mubr.f32.gmra.mrb[0].mxu0 %v408
    %v593 = vpop.f32.mrb[0].mxu0
    %v594 = vadd.f32 %v368, %v593
    %v595 = vpop.f32.mrb[0].mxu0
    %596 = vmatprep.mubr.f32.mxu0 0.0
    %597 = vmatmul.mubr.f32.gmra.mrb[0].mxu0 %v411
    %v598 = vpop.f32.mrb[0].mxu0
    %v599 = vadd.f32 %v368, %v598
    %v600 = vpop.f32.mrb[0].mxu0
    %601 = vmatprep.mubr.f32.mxu0 0.0
    %602 = vmatmul.mubr.f32.gmra.mrb[0].mxu0 %v414
    %v603 = vpop.f32.mrb[0].mxu0
    %v604 = vadd.f32 %v368, %v603
    %v605 = vpop.f32.mrb[0].mxu0
    %606 = vmatprep.mubr.f32.mxu0 0.0
    %607 = vmatmul.mubr.f32.gmra.mrb[0].mxu0 %v417
    %v608 = vpop.f32.mrb[0].mxu0
    %v609 = vadd.f32 %v368, %v608
    %v610 = vpop.f32.mrb[0].mxu0
    %611 = vmatprep.mubr.f32.mxu0 0.0
    %612 = vmatmul.mubr.f32.gmra.mrb[0].mxu0 %v420
    %v613 = vpop.f32.mrb[0].mxu0
    %v614 = vadd.f32 %v368, %v613
    %v615 = vpop.f32.mrb[0].mxu0
    %616 = vmatprep.mubr.f32.mxu0 0.0
    %617 = vmatmul.mubr.f32.gmra.mrb[0].mxu0 %v423
    %v618 = vpop.f32.mrb[0].mxu0
    %v619 = vadd.f32 %v368, %v618
    %v620 = vpop.f32.mrb[0].mxu0
    %621 = vmatprep.mubr.f32.mxu0 0.0
    %622 = vmatmul.mubr.f32.gmra.mrb[0].mxu0 %v426
    %v623 = vpop.f32.mrb[0].mxu0
    %v624 = vadd.f32 %v368, %v623
    %v625 = vpop.f32.mrb[0].mxu0
    %626 = vmatprep.mubr.f32.mxu0 0.0
    %627 = vmatmul.mubr.f32.gmra.mrb[0].mxu0 %v429
    %v628 = vpop.f32.mrb[0].mxu0
    %v629 = vadd.f32 %v368, %v628
    %v630 = vpop.f32.mrb[0].mxu0
    %631 = vmatprep.mubr.f32.mxu0 0.0
    %632 = vmatmul.mubr.f32.gmra.mrb[0].mxu0 %v432
    %v633 = vpop.f32.mrb[0].mxu0
    %v634 = vadd.f32 %v368, %v633
    %v635 = vpop.f32.mrb[0].mxu0
    %636 = vmatprep.mubr.f32.mxu0 0.0
    %637 = vmatmul.mubr.f32.gmra.mrb[0].mxu0 %v435
    %v638 = vpop.f32.mrb[0].mxu0
    %v639 = vadd.f32 %v368, %v638
    %v640 = vpop.f32.mrb[0].mxu0
    %641 = vmatprep.mubr.f32.mxu0 0.0
    %642 = vmatmul.mubr.f32.gmra.mrb[0].mxu0 %v438
    %v643 = vpop.f32.mrb[0].mxu0
    %v644 = vadd.f32 %v368, %v643
    %v645 = vpop.f32.mrb[0].mxu0
    %646 = vmatprep.mubr.f32.mxu0 0.0
    %647 = vmatmul.mubr.f32.gmra.mrb[0].mxu0 %v441
    %v648 = vpop.f32.mrb[0].mxu0
    %v649 = vadd.f32 %v368, %v648
    %v650 = vpop.f32.mrb[0].mxu0
    %651 = vmatprep.mubr.f32.mxu0 0.0
    %652 = vmatmul.mubr.f32.gmra.mrb[0].mxu0 %v444
    %v653 = vpop.f32.mrb[0].mxu0
    %v654 = vadd.f32 %v368, %v653
    %v655 = vpop.f32.mrb[0].mxu0
    %656 = vmatprep.mubr.f32.mxu0 0.0
    %657 = vmatmul.mubr.f32.gmra.mrb[0].mxu0 %v447
    %v658 = vpop.f32.mrb[0].mxu0
    %v659 = vadd.f32 %v368, %v658
    %v660 = vpop.f32.mrb[0].mxu0
    %661 = vmatprep.mubr.f32.mxu0 0.0
    %662 = vmatmul.mubr.f32.gmra.mrb[0].mxu0 %v450
    %v663 = vpop.f32.mrb[0].mxu0
    %v664 = vadd.f32 %v368, %v663
    %v665 = vpop.f32.mrb[0].mxu0
    %666 = vmatprep.mubr.f32.mxu0 0.0
    %667 = vmatmul.mubr.f32.gmra.mrb[0].mxu0 %v453
    %v668 = vpop.f32.mrb[0].mxu0
    %v669 = vadd.f32 %v368, %v668
    %v670 = vpop.f32.mrb[0].mxu0
    %671 = vmatprep.mubr.f32.mxu0 0.0
    %672 = vmatmul.mubr.f32.gmra.mrb[0].mxu0 %v456
    %v673 = vpop.f32.mrb[0].mxu0
    %v674 = vadd.f32 %v368, %v673
    %v675 = vpop.f32.mrb[0].mxu0
    %676 = vmatprep.mubr.f32.mxu0 0.0
    %677 = vmatmul.mubr.f32.gmra.mrb[0].mxu0 %v459
    %v678 = vpop.f32.mrb[0].mxu0
    %v679 = vadd.f32 %v368, %v678
    %v680 = vpop.f32.mrb[0].mxu0
    %681 = vmatprep.mubr.f32.mxu0 0.0
    %682 = vmatmul.mubr.f32.gmra.mrb[0].mxu0 %v462
    %v683 = vpop.f32.mrb[0].mxu0
    %v684 = vadd.f32 %v368, %v683
    %v685 = vpop.f32.mrb[0].mxu0
    %686 = vmatprep.mubr.f32.mxu0 0.0
    %687 = vmatmul.mubr.f32.gmra.mrb[0].mxu0 %v465
    %v688 = vpop.f32.mrb[0].mxu0
    %v689 = vadd.f32 %v368, %v688
    %v690 = vpop.f32.mrb[0].mxu0
    %691 = vdwg.mxu0
    %v692 = vmax.f32 %v534, 0.0
    %v693 = vmax.f32 %v539, 0.0
    %v694 = vmax.f32 %v544, 0.0
    %v695 = vmax.f32 %v549, 0.0
    %v696 = vmax.f32 %v554, 0.0
    %v697 = vmax.f32 %v559, 0.0
    %v698 = vmax.f32 %v564, 0.0
    %v699 = vmax.f32 %v569, 0.0
    %v700 = vmax.f32 %v574, 0.0
    %v701 = vmax.f32 %v579, 0.0
    %v702 = vmax.f32 %v584, 0.0
    %v703 = vmax.f32 %v589, 0.0
    %v704 = vmax.f32 %v594, 0.0
    %v705 = vmax.f32 %v599, 0.0
    %v706 = vmax.f32 %v604, 0.0
    %v707 = vmax.f32 %v609, 0.0
    %v708 = vmax.f32 %v614, 0.0
    %v709 = vmax.f32 %v619, 0.0
    %v710 = vmax.f32 %v624, 0.0
    %v711 = vmax.f32 %v629, 0.0
    %v712 = vmax.f32 %v634, 0.0
    %v713 = vmax.f32 %v639, 0.0
    %v714 = vmax.f32 %v644, 0.0
    %v715 = vmax.f32 %v649, 0.0
    %v716 = vmax.f32 %v654, 0.0
    %v717 = vmax.f32 %v659, 0.0
    %v718 = vmax.f32 %v664, 0.0
    %v719 = vmax.f32 %v669, 0.0
    %v720 = vmax.f32 %v674, 0.0
    %v721 = vmax.f32 %v679, 0.0
    %v722 = vmax.f32 %v684, 0.0
    %v723 = vmax.f32 %v689, 0.0
    %v724 = vld [vmem:[%s5] sm:$0xf]
    %v725 = vld [vmem:[#allocation2] sm:$0x1]
    %v727 = vlaneseq
    %v728 = vshrl.u32 %v727, 7
    %v729 = vsub.s32 0, %v728
    %v730 = vrot.slane %v725, %v729
    %731 = vset.pattern.permute.xlu0 0
    %732 = vperm.xlu0 %731, %v730
    %v733 = vpop.permute.xlu0 %732
    %v736 = vsel %vm370, %v724, 0
    %v739 = vsel %vm370, %v692, 0
    %v742 = vsel %vm370, %v693, 0
    %v745 = vsel %vm370, %v694, 0
    %v748 = vsel %vm370, %v695, 0
    %v751 = vsel %vm370, %v696, 0
    %v754 = vsel %vm370, %v697, 0
    %v757 = vsel %vm370, %v698, 0
    %v760 = vsel %vm370, %v699, 0
    %v763 = vsel %vm370, %v700, 0
    %v766 = vsel %vm370, %v701, 0
    %v769 = vsel %vm370, %v702, 0
    %v772 = vsel %vm370, %v703, 0
    %v775 = vsel %vm370, %v704, 0
    %v778 = vsel %vm370, %v705, 0
    %v781 = vsel %vm370, %v706, 0
    %v784 = vsel %vm370, %v707, 0
    %v787 = vsel %vm370, %v708, 0
    %v790 = vsel %vm370, %v709, 0
    %v793 = vsel %vm370, %v710, 0
    %v796 = vsel %vm370, %v711, 0
    %v799 = vsel %vm370, %v712, 0
    %v802 = vsel %vm370, %v713, 0
    %v805 = vsel %vm370, %v714, 0
    %v808 = vsel %vm370, %v715, 0
    %v811 = vsel %vm370, %v716, 0
    %v814 = vsel %vm370, %v717, 0
    %v817 = vsel %vm370, %v718, 0
    %v820 = vsel %vm370, %v719, 0
    %v823 = vsel %vm370, %v720, 0
    %v826 = vsel %vm370, %v721, 0
    %v829 = vsel %vm370, %v722, 0
    %v832 = vsel %vm370, %v723, 0
    %834 = vmatprep.subr.mxu0 0.0
    %835 = vmatpush1.xpose.msra.mxu0 %v739
    %836 = vmatprep.subr.mxu0 0.0
    %837 = vmatpush1.xpose.msra.mxu0 %v742
    %838 = vmatprep.subr.mxu0 0.0
    %839 = vmatpush1.xpose.msra.mxu0 %v745
    %840 = vmatprep.subr.mxu0 0.0
    %841 = vmatpush1.xpose.msra.mxu0 %v748
    %842 = vmatprep.subr.mxu0 0.0
    %843 = vmatpush1.xpose.msra.mxu0 %v751
    %844 = vmatprep.subr.mxu0 0.0
    %845 = vmatpush1.xpose.msra.mxu0 %v754
    %846 = vmatprep.subr.mxu0 0.0
    %847 = vmatpush1.xpose.msra.mxu0 %v757
    %848 = vmatprep.subr.mxu0 0.0
    %849 = vmatpush1.xpose.msra.mxu0 %v760
    %850 = vmatprep.subr.mxu0 0.0
    %851 = vmatpush1.xpose.msra.mxu0 %v763
    %852 = vmatprep.subr.mxu0 0.0
    %853 = vmatpush1.xpose.msra.mxu0 %v766
    %854 = vmatprep.subr.mxu0 0.0
    %855 = vmatpush1.xpose.msra.mxu0 %v769
    %856 = vmatprep.subr.mxu0 0.0
    %857 = vmatpush1.xpose.msra.mxu0 %v772
    %858 = vmatprep.subr.mxu0 0.0
    %859 = vmatpush1.xpose.msra.mxu0 %v775
    %860 = vmatprep.subr.mxu0 0.0
    %861 = vmatpush1.xpose.msra.mxu0 %v778
    %862 = vmatprep.subr.mxu0 0.0
    %863 = vmatpush1.xpose.msra.mxu0 %v781
    %864 = vmatprep.subr.mxu0 0.0
    %865 = vmatpush1.xpose.msra.mxu0 %v784
    %866 = vmatprep.subr.mxu0 0.0
    %867 = vmatpush1.xpose.msra.mxu0 %v787
    %868 = vmatprep.subr.mxu0 0.0
    %869 = vmatpush1.xpose.msra.mxu0 %v790
    %870 = vmatprep.subr.mxu0 0.0
    %871 = vmatpush1.xpose.msra.mxu0 %v793
    %872 = vmatprep.subr.mxu0 0.0
    %873 = vmatpush1.xpose.msra.mxu0 %v796
    %874 = vmatprep.subr.mxu0 0.0
    %875 = vmatpush1.xpose.msra.mxu0 %v799
    %876 = vmatprep.subr.mxu0 0.0
    %877 = vmatpush1.xpose.msra.mxu0 %v802
    %878 = vmatprep.subr.mxu0 0.0
    %879 = vmatpush1.xpose.msra.mxu0 %v805
    %880 = vmatprep.subr.mxu0 0.0
    %881 = vmatpush1.xpose.msra.mxu0 %v808
    %882 = vmatprep.subr.mxu0 0.0
    %883 = vmatpush1.xpose.msra.mxu0 %v811
    %884 = vmatprep.subr.mxu0 0.0
    %885 = vmatpush1.xpose.msra.mxu0 %v814
    %886 = vmatprep.subr.mxu0 0.0
    %887 = vmatpush1.xpose.msra.mxu0 %v817
    %888 = vmatprep.subr.mxu0 0.0
    %889 = vmatpush1.xpose.msra.mxu0 %v820
    %890 = vmatprep.subr.mxu0 0.0
    %891 = vmatpush1.xpose.msra.mxu0 %v823
    %892 = vmatprep.subr.mxu0 0.0
    %893 = vmatpush1.xpose.msra.mxu0 %v826
    %894 = vmatprep.subr.mxu0 0.0
    %895 = vmatpush1.xpose.msra.mxu0 %v829
    %896 = vmatprep.subr.mxu0 0.0
    %897 = vmatpush1.xpose.msra.mxu0 %v832
    %898 = vmatprep.mubr.f32.mxu0 0.0
    %899 = vmatmul.mubr.f32.gmra.mrb[0].mxu0 %v736
    %v900 = vpop.f32.mrb[0].mxu0
    %v901 = vadd.f32 %v733, %v900
    %v902 = vpop.f32.mrb[0].mxu0
    %v903 = vadd.f32 %v733, %v902
    %904 = vdwg.mxu0
    %v907 = vcombine.low %v901, %v903
    %909 = vst [vmem:[#allocation6] sm:$0xff] %v907
    // Predicated region
    $region34: #{tpu_custom_call.1} parent=1 // pred_check
      _
    $region35: #{tpu_custom_call.1} parent=1 // pred_check_branch
      %911 = sbr.rel (0) target = $region37
    $region36: #{tpu_custom_call.1} parent=1 // pred_region
      %s913 = ssub.s32 128, 128
      %914 = vsyncadd [#allocation5], %s913
      %s916 = sshll.u32 [#allocation6], 4
      %s917 = int_to_ptr.vmem [resolvable:$true] %s916
      %919 = dma.vmem_to_hbm [thread:$0]  %s917, 128, %s7, [#allocation5]
    $region37: #{tpu_custom_call.1} parent=1 // pred_fallthru
      _
    // Predicated region
    $region38: #{tpu_custom_call.1} parent=1 // pred_check
      _
    $region39: #{tpu_custom_call.1} parent=1 // pred_check_branch
      %921 = sbr.rel (0) target = $region41
    $region40: #{tpu_custom_call.1} parent=1 // pred_region
      %922 = dma.done [#allocation5], 128
    $region41: #{tpu_custom_call.1} parent=1 // pred_fallthru
      _
    %923 = vsyncpa [#allocation4], 1
    %924 = vsyncpa [#allocation5], 1

</llo_original>
